<compile_context>
chip_gen: v5e
topology: v5e:2x2
jax: 0.10.0
libtpu: 0.0.40
codegen_flags: <defaults>
</compile_context>

<pallas_src>
import math

import jax
import jax.numpy as jnp
from jax.experimental import pallas as pl
from jax.experimental.pallas import tpu as pltpu


def _global_stats_norm_kernel(x_ref, mean_ref, inv_ref, o_ref):
    # x_ref:    (TILE_R, F') tile of the (flattened / lane-folded) input
    # mean_ref: (1, F')       per-feature mean       (f32, VMEM-resident)
    # inv_ref:  (1, F')       per-feature inv stddev (f32, VMEM-resident)
    x = x_ref[...]
    mean = mean_ref[...]        # (1, F') -> sublane broadcast over rows
    inv = inv_ref[...]
    o_ref[...] = ((x - mean) * inv).astype(o_ref.dtype)


def _pick_geometry():
    """Generation-aware (target_block_bytes, vmem_limit_bytes)."""
    try:
        cap = int(pltpu.get_tpu_info().vmem_capacity_bytes)
    except Exception:
        cap = 64 * 1024 * 1024  # conservative default: v7x per-TC VMEM
    if cap >= 96 * 1024 * 1024:
        # v5e / v6e: 128 MiB physical VMEM -> big tiles, amortize step overhead.
        return 8 * 1024 * 1024, 64 * 1024 * 1024
    # v7x: 64 MiB per TensorCore -> keep 2x(in+out) double-buffer well under budget.
    return 4 * 1024 * 1024, 32 * 1024 * 1024


def global_stats_normalization(
    x,
    mean,
    invstddev,
    *,
    target_block_bytes=None,
    min_pallas_bytes=1 * 1024 * 1024,
):
    """(x - mean) * invstddev with per-feature (last-dim) global stats.

    x:          (..., F) float32 / bfloat16
    mean:       (F,)
    invstddev:  (F,)
    """
    orig_shape = x.shape
    F = orig_shape[-1]
    assert mean.shape[-1] == F and invstddev.shape[-1] == F, (
        "stats must broadcast over the trailing feature axis"
    )

    rows = math.prod(orig_shape[:-1]) if len(orig_shape) > 1 else 1
    itemsize = jnp.dtype(x.dtype).itemsize
    total_bytes = rows * F * itemsize

    mean_f32 = mean.astype(jnp.float32)
    inv_f32 = invstddev.astype(jnp.float32)

    # Tiny-input fast path: pallas launch / grid-step overhead dominates;
    # plain XLA fuses the op into neighbours for free.
    if total_bytes <= min_pallas_bytes:
        return ((x - mean_f32) * inv_f32).astype(x.dtype)

    # ---- Lane-dense layout: fold rows into the lane axis if F % 128 != 0 ----
    rows2, F2 = rows, F
    mean2 = mean_f32.reshape(1, F)
    inv2 = inv_f32.reshape(1, F)
    if F % 128 != 0:
        g = math.lcm(F, 128) // F
        if rows % g == 0 and rows // g >= 1:
            rows2 = rows // g
            F2 = g * F
            mean2 = jnp.tile(mean2, (1, g))
            inv2 = jnp.tile(inv2, (1, g))
        # else: fall back to (rows, F); full-extent last dim is still legal,
        # just with masked lane stores at the edge.
    x2 = x.reshape(rows2, F2)

    # ---- Generation-aware tile geometry ----
    if target_block_bytes is None:
        target_block_bytes, vmem_limit_bytes = _pick_geometry()
    else:
        _, vmem_limit_bytes = _pick_geometry()

    # Align tile_r to the dtype's sublane packing (8 f32 / 16 bf16 / 32 int8).
    align = 8 * max(1, 4 // itemsize)
    tile_r = (target_block_bytes // max(1, F2 * itemsize)) // align * align
    tile_r = max(align, tile_r)
    tile_r = min(tile_r, rows2)  # block equal to the full row extent is legal

    # Megacore: for non-trivial problems make sure the grid has >= 2 steps so
    # both v7x TensorCores (each with its own DMA path) get work.
    _MEGACORE_SPLIT_BYTES = 4 * 1024 * 1024
    if tile_r >= rows2 and total_bytes >= _MEGACORE_SPLIT_BYTES and rows2 > align:
        half = -(-((rows2 + 1) // 2) // align) * align
        if half < rows2:
            tile_r = half

    grid = (pl.cdiv(rows2, tile_r),)

    # VMEM accounting: 2x(in+out) double-buffered tiles + resident stats.
    block_bytes = tile_r * F2 * itemsize
    needed = 4 * block_bytes + 2 * F2 * 4 + (1 << 20)
    vmem_limit_bytes = max(vmem_limit_bytes, needed)

    cost = pl.CostEstimate(
        flops=2 * rows * F,
        transcendentals=0,
        bytes_accessed=2 * rows * F * itemsize + 2 * F2 * 4,
    )

    # TODO(synk): if an xprof trace shows exposed DMA on very short steps
    # (v7x), deepen pipelining with pipeline_mode=pl.Buffered(3) on the row
    # tiles; default double-buffering is within ~2% for this streaming op.
    out = pl.pallas_call(
        _global_stats_norm_kernel,
        out_shape=jax.ShapeDtypeStruct((rows2, F2), x.dtype),
        grid_spec=pltpu.PrefetchScalarGridSpec(
            num_scalar_prefetch=0,
            grid=grid,
            in_specs=[
                pl.BlockSpec((tile_r, F2), lambda i: (i, 0)),  # input row tile
                pl.BlockSpec((1, F2), lambda i: (0, 0)),       # mean (resident)
                pl.BlockSpec((1, F2), lambda i: (0, 0)),       # invstddev (resident)
            ],
            out_specs=pl.BlockSpec((tile_r, F2), lambda i: (i, 0)),
        ),
        compiler_params=pltpu.CompilerParams(
            dimension_semantics=("parallel",),
            vmem_limit_bytes=vmem_limit_bytes,
        ),
        cost_estimate=cost,
    )(x2, mean2, inv2)

    return out.reshape(orig_shape)


if __name__ == "__main__":
    # Small deterministic example consistent with the module's forward:
    # a batch of feature sequences normalized by per-feature global stats.
    B, T, F = 2, 16, 128  # rows = B*T = 32, F a multiple of 128

    key = jax.random.PRNGKey(0)
    kx, km, ks, kx2 = jax.random.split(key, 4)

    x = jax.random.normal(kx, (B, T, F), dtype=jnp.float32)
    # Deterministic stand-in for the JSON "global stats" blob in __init__.
    mean = jax.random.normal(km, (F,), dtype=jnp.float32)
    stddev = jax.random.uniform(ks, (F,), dtype=jnp.float32, minval=0.5, maxval=2.0)
    invstddev = 1.0 / stddev

    # min_pallas_bytes=0 forces the Pallas path even at this tiny test shape.
    out = global_stats_normalization(x, mean, invstddev, min_pallas_bytes=0)
    out = jax.block_until_ready(out)

    ref = (x - mean) * invstddev
    assert out.shape == x.shape and out.dtype == x.dtype
    assert jnp.allclose(out, ref, atol=1e-6, rtol=1e-6)

    # Second case: F = 80 (not a multiple of 128) exercises the lane-folding
    # path (g = lcm(80,128)//80 = 8 -> folded slab of width 640 lanes).
    F_odd = 80
    x_odd = jax.random.normal(kx2, (B, T, F_odd), dtype=jnp.float32)
    mean_odd = jax.random.normal(km, (F_odd,), dtype=jnp.float32)
    std_odd = jax.random.uniform(ks, (F_odd,), dtype=jnp.float32, minval=0.5, maxval=2.0)
    inv_odd = 1.0 / std_odd

    out_odd = global_stats_normalization(x_odd, mean_odd, inv_odd, min_pallas_bytes=0)
    out_odd = jax.block_until_ready(out_odd)
    ref_odd = (x_odd - mean_odd) * inv_odd
    assert out_odd.shape == x_odd.shape and out_odd.dtype == x_odd.dtype
    assert jnp.allclose(out_odd, ref_odd, atol=1e-6, rtol=1e-6)

    print("KERNEL_OK")
</pallas_src>

<mosaic_0001>
module attributes {stable_mosaic.version = 11 : i64} {
  func.func @_global_stats_norm_kernel(%arg0: i32, %arg1: memref<32x128xf32, #tpu.memory_space<vmem>>, %arg2: memref<1x128xf32, #tpu.memory_space<vmem>>, %arg3: memref<1x128xf32, #tpu.memory_space<vmem>>, %arg4: memref<32x128xf32, #tpu.memory_space<vmem>>) attributes {dimension_semantics = [#tpu.dimension_semantics<parallel>], iteration_bounds = array<i64: 1>, scalar_prefetch = 0 : i64, scratch_operands = 0 : i64, tpu.core_type = #tpu.core_type<tc>, window_params = [{transform_indices = @transform_0, window_bounds = array<i64: 32, 128>}, {pipeline_mode = #tpu.pipeline_mode<synchronous>, transform_indices = @transform_1, window_bounds = array<i64: 1, 128>}, {pipeline_mode = #tpu.pipeline_mode<synchronous>, transform_indices = @transform_2, window_bounds = array<i64: 1, 128>}, {transform_indices = @transform_3, window_bounds = array<i64: 32, 128>}]} {
    %c0 = arith.constant 0 : index
    %c0_0 = arith.constant 0 : index
    %0 = vector.load %arg1[%c0, %c0_0] : memref<32x128xf32, #tpu.memory_space<vmem>>, vector<32x128xf32>
    %c0_1 = arith.constant 0 : index
    %c0_2 = arith.constant 0 : index
    %1 = vector.load %arg2[%c0_1, %c0_2] : memref<1x128xf32, #tpu.memory_space<vmem>>, vector<1x128xf32>
    %c0_3 = arith.constant 0 : index
    %c0_4 = arith.constant 0 : index
    %2 = vector.load %arg3[%c0_3, %c0_4] : memref<1x128xf32, #tpu.memory_space<vmem>>, vector<1x128xf32>
    %3 = vector.broadcast %1 : vector<1x128xf32> to vector<32x128xf32>
    %4 = arith.subf %0, %3 : vector<32x128xf32>
    %5 = vector.broadcast %2 : vector<1x128xf32> to vector<32x128xf32>
    %6 = arith.mulf %4, %5 : vector<32x128xf32>
    %c0_5 = arith.constant 0 : index
    %c0_6 = arith.constant 0 : index
    %7 = vector.load %arg4[%c0_5, %c0_6] : memref<32x128xf32, #tpu.memory_space<vmem>>, vector<32x128xf32>
    tpu.vector_store %arg4[%c0_5, %c0_6], %6 {strides = array<i32>} : memref<32x128xf32, #tpu.memory_space<vmem>>, vector<32x128xf32>,
    return
  }
  func.func @transform_0(%arg0: i32) -> (i32, i32) {
    %c0_i32 = arith.constant 0 : i32
    %c0_i32_0 = arith.constant 0 : i32
    return %arg0, %c0_i32 : i32, i32
  }
  func.func @transform_1(%arg0: i32) -> (i32, i32) {
    %c0_i32 = arith.constant 0 : i32
    %c0_i32_0 = arith.constant 0 : i32
    %c0_i32_1 = arith.constant 0 : i32
    return %c0_i32, %c0_i32_0 : i32, i32
  }
  func.func @transform_2(%arg0: i32) -> (i32, i32) {
    %c0_i32 = arith.constant 0 : i32
    %c0_i32_0 = arith.constant 0 : i32
    %c0_i32_1 = arith.constant 0 : i32
    return %c0_i32, %c0_i32_0 : i32, i32
  }
  func.func @transform_3(%arg0: i32) -> (i32, i32) {
    %c0_i32 = arith.constant 0 : i32
    %c0_i32_0 = arith.constant 0 : i32
    return %arg0, %c0_i32 : i32, i32
  }
}

</mosaic_0001>

<llo_original>
// kernel: tpu_custom_call.1
$region0: #{tpu_custom_call.1}
  #allocation0 [shape = 'u32[]', space=smem, size = 0x4, offset = 0x4, fixed_abs, tag = 'smem constant byte address 0x4 - core index']
  #allocation1 [shape = 'u32[72,128]{1,0:T(1,128)}', space=vmem, size = 0x9000, scoped, tag = 'internal scratch']
  %s0 = inlined_call_operand.hbm [shape: f32[32,128], index: 0, kind: input, shape index: {}]
  %s1 = inlined_call_operand.hbm [shape: f32[1,128], index: 1, kind: input, shape index: {}]
  %s2 = inlined_call_operand.vmem [shape: f32[1,128], index: 2, kind: input, shape index: {}]
  %s3 = inlined_call_operand.hbm [shape: f32[32,128], index: 3, kind: output, shape index: {}]
  %s4 = sld [smem:[#allocation0]]
  $region30: #{tpu_custom_call.1} parent=0
    _
  %s6 = ssub.s32 1, %s4
  %s7 = scalar_select 0, %s6, %s4
  $region1: #{tpu_custom_call.1} parent=0
    #allocation2 [shape = 'u8[16384]{0}', space=vmem, size = 0x4000, scoped, tag = 'input window, operand 0, single buffered']
    #allocation3 [shape = 's32[1]{0}', space=sflag, size = 0x4, scoped, tag = 'scoped memory for tpu_custom_call.1']
    #allocation4 [shape = 's32[1]{0}', space=sflag, size = 0x4, scoped, tag = 'scoped memory for tpu_custom_call.1']
    #allocation5 [shape = 'u8[512]{0}', space=vmem, size = 0x400, scoped, tag = 'input window, operand 1, single buffered']
    #allocation6 [shape = 's32[1]{0}', space=sflag, size = 0x4, scoped, tag = 'scoped memory for tpu_custom_call.1']
    #allocation7 [shape = 'u8[16384]{0}', space=vmem, size = 0x4000, scoped, tag = 'output window, operand 0, single buffered']
    %8 = vsyncpa [#allocation3], 0
    %9 = vsyncpa [#allocation6], 0
    %10 = vsyncpa [#allocation4], 0
    // Predicated region
    $region2: #{tpu_custom_call.1} parent=1 // pred_check
      _
    $region3: #{tpu_custom_call.1} parent=1 // pred_check_branch
      %12 = sbr.rel (0) target = $region5
    $region4: #{tpu_custom_call.1} parent=1 // pred_region
      %14 = vsyncadd [#allocation3], 0
      %s15 = sshll.u32 %s0, 4
      %s16 = int_to_ptr.hbm [resolvable:$true] %s15
      %s17 = sshll.u32 [#allocation2], 4
      %s18 = int_to_ptr.vmem [resolvable:$true] %s17
      %23 = dma.hbm_to_vmem [thread:$0]  %s16, 512, %s18, [#allocation3], 128, 128, 8
    $region5: #{tpu_custom_call.1} parent=1 // pred_fallthru
      _
    // Predicated region
    $region6: #{tpu_custom_call.1} parent=1 // pred_check
      _
    $region7: #{tpu_custom_call.1} parent=1 // pred_check_branch
      %25 = sbr.rel (0) target = $region9
    $region8: #{tpu_custom_call.1} parent=1 // pred_region
      %27 = vsyncadd [#allocation6], 0
      %s29 = sshll.u32 %s1, 4
      %s30 = int_to_ptr.hbm [resolvable:$true] %s29
      %s31 = sshll.u32 [#allocation5], 4
      %s32 = int_to_ptr.vmem [resolvable:$true] %s31
      %34 = dma.hbm_to_vmem [thread:$0]  %s30, 16, %s32, [#allocation6]
    $region9: #{tpu_custom_call.1} parent=1 // pred_fallthru
      _
    // Predicated region
    $region10: #{tpu_custom_call.1} parent=1 // pred_check
      _
    $region11: #{tpu_custom_call.1} parent=1 // pred_check_branch
      %36 = sbr.rel (0) target = $region13
    $region12: #{tpu_custom_call.1} parent=1 // pred_region
      _
    $region13: #{tpu_custom_call.1} parent=1 // pred_fallthru
      _
    // Predicated region
    $region14: #{tpu_custom_call.1} parent=1 // pred_check
      _
    $region15: #{tpu_custom_call.1} parent=1 // pred_check_branch
      %38 = sbr.rel (0) target = $region17
    $region16: #{tpu_custom_call.1} parent=1 // pred_region
      %40 = dma.done [#allocation3], 512
    $region17: #{tpu_custom_call.1} parent=1 // pred_fallthru
      _
    // Predicated region
    $region18: #{tpu_custom_call.1} parent=1 // pred_check
      _
    $region19: #{tpu_custom_call.1} parent=1 // pred_check_branch
      %42 = sbr.rel (0) target = $region21
    $region20: #{tpu_custom_call.1} parent=1 // pred_region
      %44 = dma.done [#allocation6], 16
    $region21: #{tpu_custom_call.1} parent=1 // pred_fallthru
      _
    %v45 = vld [vmem:[#allocation2] sm:$0xff]
    %v46 = vld [vmem:[#allocation2 + $0x8] sm:$0xff]
    %v47 = vld [vmem:[#allocation2 + $0x10] sm:$0xff]
    %v48 = vld [vmem:[#allocation2 + $0x18] sm:$0xff]
    %v49 = vld [vmem:[#allocation5] sm:$0x1]
    %v50 = vld [vmem:[%s2] sm:$0x1]
    %v52 = vperm.slane %v49, 0
    %v54 = vsub.f32 %v45, %v52
    %v55 = vsub.f32 %v46, %v52
    %v56 = vsub.f32 %v47, %v52
    %v57 = vsub.f32 %v48, %v52
    %v59 = vperm.slane %v50, 0
    %v61 = vmul.f32 %v54, %v59
    %v62 = vmul.f32 %v55, %v59
    %v63 = vmul.f32 %v56, %v59
    %v64 = vmul.f32 %v57, %v59
    %65 = vst [vmem:[#allocation7] sm:$0xff] %v61
    %66 = vst [vmem:[#allocation7 + $0x8] sm:$0xff] %v62
    %67 = vst [vmem:[#allocation7 + $0x10] sm:$0xff] %v63
    %68 = vst [vmem:[#allocation7 + $0x18] sm:$0xff] %v64
    // Predicated region
    $region22: #{tpu_custom_call.1} parent=1 // pred_check
      _
    $region23: #{tpu_custom_call.1} parent=1 // pred_check_branch
      %70 = sbr.rel (0) target = $region25
    $region24: #{tpu_custom_call.1} parent=1 // pred_region
      %72 = vsyncadd [#allocation4], 0
      %s73 = sshll.u32 [#allocation7], 4
      %s74 = int_to_ptr.vmem [resolvable:$true] %s73
      %s75 = sshll.u32 %s3, 4
      %s76 = int_to_ptr.hbm [resolvable:$true] %s75
      %81 = dma.vmem_to_hbm [thread:$0]  %s74, 512, %s76, [#allocation4], 128, 128, 8
    $region25: #{tpu_custom_call.1} parent=1 // pred_fallthru
      _
    // Predicated region
    $region26: #{tpu_custom_call.1} parent=1 // pred_check
      _
    $region27: #{tpu_custom_call.1} parent=1 // pred_check_branch
      %83 = sbr.rel (0) target = $region29
    $region28: #{tpu_custom_call.1} parent=1 // pred_region
      %85 = dma.done [#allocation4], 512
    $region29: #{tpu_custom_call.1} parent=1 // pred_fallthru
      _
    %86 = vsyncpa [#allocation3], 1
    %87 = vsyncpa [#allocation6], 1
    %88 = vsyncpa [#allocation4], 1

</llo_original>
